<compile_context>
chip_gen: v5e
topology: v5e:2x2
jax: 0.10.0
libtpu: 0.0.40
codegen_flags: <defaults>
</compile_context>

<pallas_src>
from functools import lru_cache, partial

import numpy as np
import jax
import jax.numpy as jnp
from jax.experimental import pallas as pl
from jax.experimental.pallas import tpu as pltpu


LANE = 128


def _round_up(x, m):
    return (x + m - 1) // m * m


@lru_cache(maxsize=None)
def _vmem_limit_bytes():
    # Leave headroom: ~48 MiB on v7x (64 MiB physical/TC), ~96 MiB on v5e/v6e.
    try:
        return int(pltpu.get_tpu_info().vmem_capacity_bytes * 3 // 4)
    except Exception:
        return None


def _compiler_params(dims):
    kw = {"dimension_semantics": dims}
    lim = _vmem_limit_bytes()
    if lim:
        kw["vmem_limit_bytes"] = lim
    return pltpu.CompilerParams(**kw)


# ----------------------------------------------------------------------------
# Pallas kernels
# ----------------------------------------------------------------------------

def _conv_kernel(*refs, K, Cin, dilation, T_out, begin, end, relu, has_add,
                 emit_stats):
    """One batch element of a 'valid' dilated conv, fully fused:

      out[begin + t, :] = relu( sum_k x[t + k*d] @ W_k + bias (+ add[t]) )
      out[:begin]  = out[begin+T_out:] = 0          (ZeroTemporalPad folded in)
      stats[b]     = [sum_t out, sum_t out^2]       (for the following FreqNorm)
    """
    i = 0
    x_ref = refs[i]; i += 1
    w_ref = refs[i]; i += 1
    b_ref = refs[i]; i += 1
    add_ref = None
    if has_add:
        add_ref = refs[i]; i += 1
    o_ref = refs[i]; i += 1
    st_ref = refs[i] if emit_stats else None

    Cout = w_ref.shape[-1]

    # Direct-form dilated conv: K bf16 matmuls with 128-multiple contraction (Cin),
    # accumulated in f32.  Weight rows for tap k live at sublane offset k*Cin
    # (a multiple of 128 -> aligned, free slice).
    if K == 1:
        acc = jnp.dot(x_ref[0], w_ref[...], preferred_element_type=jnp.float32)
    else:
        acc = jnp.dot(x_ref[0, pl.ds(0, T_out), :], w_ref[pl.ds(0, Cin), :],
                      preferred_element_type=jnp.float32)
        for k in range(1, K):
            xk = x_ref[0, pl.ds(k * dilation, T_out), :]
            wk = w_ref[pl.ds(k * Cin, Cin), :]
            acc = acc + jnp.dot(xk, wk, preferred_element_type=jnp.float32)

    acc = acc + b_ref[...].astype(jnp.float32)
    if has_add:
        acc = acc + add_ref[0].astype(jnp.float32)
    if relu:
        acc = jnp.maximum(acc, 0.0)

    # ZeroTemporalPad folded into the store (torch pads the conv OUTPUT, post-ReLU).
    # Output VMEM blocks are not zero-initialized, so edge rows get explicit zeros.
    out = acc.astype(o_ref.dtype)
    if begin == 0 and end == 0:
        o_ref[0] = out
    else:
        o_ref[0, pl.ds(begin, T_out), :] = out
        if begin > 0:
            o_ref[0, pl.ds(0, begin), :] = jnp.zeros((begin, Cout), o_ref.dtype)
        if end > 0:
            o_ref[0, pl.ds(begin + T_out, end), :] = jnp.zeros((end, Cout), o_ref.dtype)

    if emit_stats:
        # Pad rows are zero -> sums over the valid rows == sums over the padded tensor.
        s = jnp.sum(acc, axis=0, keepdims=True)
        ss = jnp.sum(acc * acc, axis=0, keepdims=True)
        st_ref[0] = jnp.concatenate([s, ss], axis=0)      # (2, Cout) f32


def conv1d(x, w, bias, *, K=1, dilation=1, relu=False, pad=(0, 0), add=None,
           emit_stats=False):
    """Fused dilated conv over time.

    x: (B, T, Cin) bf16, w: (K*Cin, Cout) bf16 (taps stacked on rows), bias: (1, Cout) f32.
    Returns (B, T_out+pad, Cout) [, per-batch stats (B, 2, Cout) f32].
    """
    B, T, Cin = x.shape
    KC, Cout = w.shape
    assert KC == K * Cin
    begin, end = pad
    T_out = T - dilation * (K - 1)
    assert T_out > 0
    T_pad = T_out + begin + end
    if add is not None:
        assert K == 1 and add.shape == (B, T, Cout)

    kern = partial(_conv_kernel, K=K, Cin=Cin, dilation=dilation, T_out=T_out,
                   begin=begin, end=end, relu=relu,
                   has_add=add is not None, emit_stats=emit_stats)

    in_specs = [
        pl.BlockSpec((1, T, Cin), lambda i: (i, 0, 0)),
        pl.BlockSpec((KC, Cout), lambda i: (0, 0)),
        pl.BlockSpec((1, Cout), lambda i: (0, 0)),
    ]
    args = [x, w, bias]
    if add is not None:
        in_specs.append(pl.BlockSpec((1, T, Cout), lambda i: (i, 0, 0)))
        args.append(add)

    out_shapes = [jax.ShapeDtypeStruct((B, T_pad, Cout), x.dtype)]
    out_specs = [pl.BlockSpec((1, T_pad, Cout), lambda i: (i, 0, 0))]
    if emit_stats:
        out_shapes.append(jax.ShapeDtypeStruct((B, 2, Cout), jnp.float32))
        out_specs.append(pl.BlockSpec((1, 2, Cout), lambda i: (i, 0, 0)))

    return pl.pallas_call(
        kern,
        out_shape=tuple(out_shapes) if emit_stats else out_shapes[0],
        grid=(B,),
        in_specs=in_specs,
        out_specs=tuple(out_specs) if emit_stats else out_specs[0],
        compiler_params=_compiler_params(("parallel",)),
    )(*args)


def _freqnorm_kernel(*refs, n, eps, has_res):
    """Finish FreqNorm from precomputed per-batch sums, fused with affine + residual.

    Training-mode batch statistics (the torch module is used without .eval(); an
    eval-mode BatchNorm1d would use running stats instead).
    """
    i = 0
    c_ref = refs[i]; i += 1
    st_ref = refs[i]; i += 1
    g_ref = refs[i]; i += 1
    b_ref = refs[i]; i += 1
    res_ref = None
    if has_res:
        res_ref = refs[i]; i += 1
    o_ref = refs[i]

    tot = jnp.sum(st_ref[...], axis=0)                    # (2, C) f32, reduce over batch
    inv_n = 1.0 / n
    mean = tot[0:1, :] * inv_n
    # E[x^2] - E[x]^2 in f32: fine for post-ReLU activations at this scale.
    var = tot[1:2, :] * inv_n - mean * mean
    inv = jax.lax.rsqrt(var + eps)
    scale = inv * g_ref[...]
    shift = b_ref[...] - mean * scale

    y = c_ref[0].astype(jnp.float32) * scale + shift
    if has_res:
        y = y + res_ref[0].astype(jnp.float32)
    o_ref[0] = y.astype(o_ref.dtype)


def freqnorm_apply(c, stats, gamma, beta, residual=None, eps=1e-5):
    """FreqNorm over (batch, time) per channel, from fused stats.  grid=(B,) parallel."""
    B, T, C = c.shape
    kern = partial(_freqnorm_kernel, n=float(B * T), eps=eps,
                   has_res=residual is not None)
    in_specs = [
        pl.BlockSpec((1, T, C), lambda i: (i, 0, 0)),
        pl.BlockSpec((B, 2, C), lambda i: (0, 0, 0)),     # tiny, fetched once
        pl.BlockSpec((1, C), lambda i: (0, 0)),
        pl.BlockSpec((1, C), lambda i: (0, 0)),
    ]
    args = [c, stats, gamma, beta]
    if residual is not None:
        in_specs.append(pl.BlockSpec((1, T, C), lambda i: (i, 0, 0)))
        args.append(residual)
    return pl.pallas_call(
        kern,
        out_shape=jax.ShapeDtypeStruct((B, T, C), c.dtype),
        grid=(B,),
        in_specs=in_specs,
        out_specs=pl.BlockSpec((1, T, C), lambda i: (i, 0, 0)),
        compiler_params=_compiler_params(("parallel",)),
    )(*args)


# ----------------------------------------------------------------------------
# Module building blocks
# ----------------------------------------------------------------------------

def residual_block(x, layers, kernel_size, dilation):
    """x + (Conv1d -> ZeroTemporalPad -> ReLU -> FreqNorm) * n, fully fused per layer."""
    total_pad = dilation * (kernel_size - 1)
    begin = total_pad // 2
    end = total_pad - begin
    y = x
    n = len(layers)
    for i, (w, b, g, bt) in enumerate(layers):
        c, st = conv1d(y, w, b, K=kernel_size, dilation=dilation,
                       relu=True, pad=(begin, end), emit_stats=True)
        res = x if i == n - 1 else None      # residual added after the last norm
        y = freqnorm_apply(c, st, g, bt, residual=res)
    return y


def text_encoder(p, hp, texts):
    emb = jnp.take(p["emb"], texts, axis=0)                            # (B, N, CP) bf16
    x = conv1d(emb, p["prenet_w"], p["prenet_b"], relu=True)
    for d, layers in zip(hp["enc_dilations"], p["enc_blocks"]):
        x = residual_block(x, layers, hp["enc_kernel_size"], d)
    # post_net1(x) + embedding -> ReLU -> FreqNorm -> Conv1d, all fused into 3 calls
    h, st = conv1d(x, p["pn1_w"], p["pn1_b"], add=emb, relu=True, emit_stats=True)
    h = freqnorm_apply(h, st, p["pn2_gamma"], p["pn2_beta"])
    return conv1d(h, p["pn2_w"], p["pn2_b"])


def duration_predictor(p, x):
    x = residual_block(x, p["dp_b1"], 4, 1)
    x = residual_block(x, p["dp_b2"], 3, 1)
    x = residual_block(x, p["dp_b3"], 1, 1)
    x = conv1d(x, p["dp_out_w"], p["dp_out_b"])     # Conv1d(C,1), out channels lane-padded
    return x[..., 0].astype(jnp.float32)            # (B, N) log-durations


def spec_decoder(p, hp, x):
    xx = x
    for d, layers in zip(hp["dec_dilations"], p["dec_blocks"]):
        xx = residual_block(xx, layers, hp["dec_kernel_size"], d)
    y = conv1d(xx, p["dpn1_w"], p["dpn1_b"], add=x)                    # post_net1(xx) + x
    y = residual_block(y, p["dpn2_block"], hp["dec_kernel_size"], 1)
    y = conv1d(y, p["dout_w"], p["dout_b"])                            # final_activation = Identity
    return y


def positional_encoding(channels, length):
    # TODO(synk): repo's positional_encoding() source not given; standard transformer
    # sinusoidal encoding (length, channels) is assumed.
    pos = np.arange(length, dtype=np.float32)[:, None]
    i = np.arange(channels, dtype=np.float32)[None, :]
    angle = pos / np.power(10000.0, (2.0 * np.floor(i / 2.0)) / channels)
    pe = np.where((np.arange(channels) % 2) == 0, np.sin(angle), np.cos(angle))
    return pe.astype(np.float32)


def expand_enc(encodings, durations_np, logical_channels):
    """repeat_interleave each phoneme encoding by its duration, Pad(0) to the max total
    length, add the (duration-mode) positional encoding.  Padded frames end up exactly
    zero, matching torch (both the encodings and the PE are zero-padded there).

    Durations are concrete host integers (output length is data-dependent, which
    requires static shapes in JAX), so gather indices are built in numpy.
    """
    B, N = durations_np.shape
    CP = encodings.shape[-1]
    T_out = int(durations_np.sum(axis=1).max())
    idx = np.zeros((B, T_out), np.int32)
    mask = np.zeros((B, T_out, 1), np.float32)
    for b in range(B):
        rep = np.repeat(np.arange(N, dtype=np.int32), durations_np[b])
        idx[b, : rep.shape[0]] = rep
        mask[b, : rep.shape[0], 0] = 1.0
    gathered = jnp.take_along_axis(encodings, jnp.asarray(idx)[..., None], axis=1)
    pe = positional_encoding(logical_channels, T_out)                   # (T_out, C) f32
    pe = np.pad(pe, ((0, 0), (0, CP - logical_channels)))               # lane padding
    out = (gathered.astype(jnp.float32) + jnp.asarray(pe)[None]) * jnp.asarray(mask)
    return out.astype(encodings.dtype)


def parallel_text2mel(params, hp, inputs):
    texts, tlens, durations_np, alpha = inputs
    alpha = alpha or 1.0
    # TODO(synk): the durations=None branch (round_and_mask of predicted durations)
    # needs data-dependent output shapes; only the ground-truth-durations path is
    # implemented, so tlens/alpha are unused (as in the torch module for this path).
    del tlens, alpha
    encodings = text_encoder(params, hp, texts)
    prd_durans = duration_predictor(params, encodings)                  # (B, N)
    expanded = expand_enc(encodings, durations_np, hp["channels"])
    melspecs = spec_decoder(params, hp, expanded)                       # (B, T, OCP)
    melspecs = melspecs[..., : hp["out_channels"]].astype(jnp.float32)
    return melspecs, prd_durans


# ----------------------------------------------------------------------------
# Deterministic parameter init (shapes follow the torch module, lane-padded to 128)
# ----------------------------------------------------------------------------

def init_params(key, hp):
    C, A, OC = hp["channels"], hp["alphabet_size"], hp["out_channels"]
    CP = _round_up(C, LANE)
    OCP = _round_up(OC, LANE)
    keys = iter(jax.random.split(key, 256))

    def nk():
        return next(keys)

    def conv_p(cin, cout, K, cin_p, cout_p):
        bound = 1.0 / np.sqrt(cin * K)
        w = jax.random.uniform(nk(), (K, cin, cout), jnp.float32, -bound, bound)
        b = jax.random.uniform(nk(), (cout,), jnp.float32, -bound, bound)
        wp = jnp.zeros((K, cin_p, cout_p), jnp.float32).at[:, :cin, :cout].set(w)
        bp = jnp.zeros((1, cout_p), jnp.float32).at[0, :cout].set(b)
        # tap-stacked layout: rows [W[0]; W[1]; ...] -> (K*Cin_p, Cout_p), bf16 for MXU.
        return wp.reshape(K * cin_p, cout_p).astype(jnp.bfloat16), bp

    def norm_p():
        g = jnp.zeros((1, CP), jnp.float32).at[0, :C].set(1.0)
        bt = jnp.zeros((1, CP), jnp.float32)
        return g, bt

    def res_layers(n, K):
        return [conv_p(C, C, K, CP, CP) + norm_p() for _ in range(n)]

    p = {}
    emb = jax.random.normal(nk(), (A, C), jnp.float32)
    emb = emb.at[0].set(0.0)                                   # padding_idx = 0
    p["emb"] = jnp.zeros((A, CP), jnp.float32).at[:, :C].set(emb).astype(jnp.bfloat16)

    p["prenet_w"], p["prenet_b"] = conv_p(C, C, 1, CP, CP)
    p["enc_blocks"] = [res_layers(2, hp["enc_kernel_size"]) for _ in hp["enc_dilations"]]
    p["pn1_w"], p["pn1_b"] = conv_p(C, C, 1, CP, CP)
    p["pn2_gamma"], p["pn2_beta"] = norm_p()
    p["pn2_w"], p["pn2_b"] = conv_p(C, C, 1, CP, CP)

    p["dp_b1"] = res_layers(1, 4)
    p["dp_b2"] = res_layers(1, 3)
    p["dp_b3"] = res_layers(1, 1)
    p["dp_out_w"], p["dp_out_b"] = conv_p(C, 1, 1, CP, LANE)   # Conv1d(C, 1), lane-padded

    p["dec_blocks"] = [res_layers(2, hp["dec_kernel_size"]) for _ in hp["dec_dilations"]]
    p["dpn1_w"], p["dpn1_b"] = conv_p(C, C, 1, CP, CP)
    p["dpn2_block"] = res_layers(2, hp["dec_kernel_size"])
    p["dout_w"], p["dout_b"] = conv_p(C, OC, 1, CP, OCP)
    return p


# ----------------------------------------------------------------------------

if __name__ == "__main__":
    hp = dict(
        alphabet_size=16,
        channels=32,
        out_channels=16,
        enc_kernel_size=3,
        enc_dilations=(1, 2),
        dec_kernel_size=3,
        dec_dilations=(1, 2),
    )
    B, N = 2, 8

    root = jax.random.PRNGKey(0)
    kp, kt, kd = jax.random.split(root, 3)

    params = init_params(kp, hp)

    texts = jax.random.randint(kt, (B, N), 1, hp["alphabet_size"]).astype(jnp.int32)
    tlens = jnp.array([N, N - 2], jnp.int32)
    durations_np = np.array(jax.random.randint(kd, (B, N), 1, 4))   # writable host copy
    durations_np[1, 6:] = 0                                         # 0-masked padding
    alpha = 1.0

    melspecs, prd_durans = parallel_text2mel(
        params, hp, (texts, tlens, durations_np, alpha)
    )
    jax.block_until_ready((melspecs, prd_durans))

    T_out = int(durations_np.sum(axis=1).max())
    assert melspecs.shape == (B, T_out, hp["out_channels"]), melspecs.shape
    assert prd_durans.shape == (B, N), prd_durans.shape
    assert np.isfinite(np.asarray(melspecs)).all()
    assert np.isfinite(np.asarray(prd_durans)).all()
    print("KERNEL_OK")
</pallas_src>

<mosaic_0001>
module attributes {stable_mosaic.version = 11 : i64} {
  func.func @_conv_kernel(%arg0: i32, %arg1: memref<1x8x128xbf16, #tpu.memory_space<vmem>>, %arg2: memref<128x128xbf16, #tpu.memory_space<vmem>>, %arg3: memref<1x128xf32, #tpu.memory_space<vmem>>, %arg4: memref<1x8x128xbf16, #tpu.memory_space<vmem>>) attributes {dimension_semantics = [#tpu.dimension_semantics<parallel>], iteration_bounds = array<i64: 2>, scalar_prefetch = 0 : i64, scratch_operands = 0 : i64, tpu.core_type = #tpu.core_type<tc>, window_params = [{transform_indices = @transform_0, window_bounds = array<i64: 1, 8, 128>}, {pipeline_mode = #tpu.pipeline_mode<synchronous>, transform_indices = @transform_1, window_bounds = array<i64: 128, 128>}, {pipeline_mode = #tpu.pipeline_mode<synchronous>, transform_indices = @transform_2, window_bounds = array<i64: 1, 128>}, {transform_indices = @transform_3, window_bounds = array<i64: 1, 8, 128>}]} {
    %c0 = arith.constant 0 : index
    %c0_0 = arith.constant 0 : index
    %c0_1 = arith.constant 0 : index
    %0 = vector.load %arg1[%c0, %c0_0, %c0_1] : memref<1x8x128xbf16, #tpu.memory_space<vmem>>, vector<1x8x128xbf16>
    %1 = vector.shape_cast %0 : vector<1x8x128xbf16> to vector<8x128xbf16>
    %c0_2 = arith.constant 0 : index
    %c0_3 = arith.constant 0 : index
    %2 = vector.load %arg2[%c0_2, %c0_3] : memref<128x128xbf16, #tpu.memory_space<vmem>>, vector<128x128xbf16>
    %cst = arith.constant dense<0.000000e+00> : vector<8x128xf32>
    %3 = tpu.matmul %1, %2, %cst {dimension_numbers = #tpu.dot_dimension_numbers<[1], [0], [0], [1], [0, 0, 1, 1], [], []>} : vector<8x128xbf16>, vector<128x128xbf16>, vector<8x128xf32> -> vector<8x128xf32>
    %c0_4 = arith.constant 0 : index
    %c0_5 = arith.constant 0 : index
    %4 = vector.load %arg3[%c0_4, %c0_5] : memref<1x128xf32, #tpu.memory_space<vmem>>, vector<1x128xf32>
    %5 = vector.broadcast %4 : vector<1x128xf32> to vector<8x128xf32>
    %6 = arith.addf %3, %5 : vector<8x128xf32>
    %cst_6 = arith.constant 0.000000e+00 : f32
    %7 = vector.broadcast %cst_6 : f32 to vector<8x128xf32>
    %8 = arith.maximumf %6, %7 : vector<8x128xf32>
    %9 = arith.truncf %8 : vector<8x128xf32> to vector<8x128xbf16>
    %c0_7 = arith.constant 0 : index
    %c0_8 = arith.constant 0 : index
    %c0_9 = arith.constant 0 : index
    %10 = vector.load %arg4[%c0_7, %c0_8, %c0_9] : memref<1x8x128xbf16, #tpu.memory_space<vmem>>, vector<1x8x128xbf16>
    %11 = vector.shape_cast %10 : vector<1x8x128xbf16> to vector<8x128xbf16>
    %12 = vector.shape_cast %9 : vector<8x128xbf16> to vector<1x8x128xbf16>
    tpu.vector_store %arg4[%c0_7, %c0_8, %c0_9], %12 {strides = array<i32>} : memref<1x8x128xbf16, #tpu.memory_space<vmem>>, vector<1x8x128xbf16>,
    return
  }
  func.func @transform_0(%arg0: i32) -> (i32, i32, i32) {
    %c0_i32 = arith.constant 0 : i32
    %c0_i32_0 = arith.constant 0 : i32
    %c0_i32_1 = arith.constant 0 : i32
    return %arg0, %c0_i32, %c0_i32_0 : i32, i32, i32
  }
  func.func @transform_1(%arg0: i32) -> (i32, i32) {
    %c0_i32 = arith.constant 0 : i32
    %c0_i32_0 = arith.constant 0 : i32
    %c0_i32_1 = arith.constant 0 : i32
    return %c0_i32, %c0_i32_0 : i32, i32
  }
  func.func @transform_2(%arg0: i32) -> (i32, i32) {
    %c0_i32 = arith.constant 0 : i32
    %c0_i32_0 = arith.constant 0 : i32
    %c0_i32_1 = arith.constant 0 : i32
    return %c0_i32, %c0_i32_0 : i32, i32
  }
  func.func @transform_3(%arg0: i32) -> (i32, i32, i32) {
    %c0_i32 = arith.constant 0 : i32
    %c0_i32_0 = arith.constant 0 : i32
    %c0_i32_1 = arith.constant 0 : i32
    return %arg0, %c0_i32, %c0_i32_0 : i32, i32, i32
  }
}

</mosaic_0001>

<llo_original>
// kernel: tpu_custom_call.1
$region0: #{tpu_custom_call.1}
  #allocation0 [shape = 'u32[]', space=smem, size = 0x4, offset = 0x4, fixed_abs, tag = 'smem constant byte address 0x4 - core index']
  #allocation1 [shape = 'u32[72,128]{1,0:T(1,128)}', space=vmem, size = 0x9000, scoped, tag = 'internal scratch']
  %s0 = inlined_call_operand.hbm [shape: bf16[2,8,128], index: 0, kind: input, shape index: {}]
  %s1 = inlined_call_operand.hbm [shape: bf16[128,128], index: 1, kind: input, shape index: {}]
  %s2 = inlined_call_operand.vmem [shape: f32[1,128], index: 2, kind: input, shape index: {}]
  %s3 = inlined_call_operand.hbm [shape: bf16[2,8,128], index: 3, kind: output, shape index: {}]
  %s4 = sld [smem:[#allocation0]]
  $region53: #{tpu_custom_call.1} parent=0
    _
  %s6 = ssub.s32 1, %s4
  %s7 = scalar_select 0, %s6, %s4
  $region1: #{tpu_custom_call.1} parent=0
    #allocation2 [shape = 'u8[4096]{0}', space=vmem, size = 0x1000, scoped, tag = 'input window, operand 0']
    #allocation3 [shape = 's32[2]{0}', space=sflag, size = 0x8, scoped, tag = 'scoped memory for tpu_custom_call.1']
    #allocation4 [shape = 's32[2]{0}', space=sflag, size = 0x8, scoped, tag = 'scoped memory for tpu_custom_call.1']
    #allocation5 [shape = 'u8[32768]{0}', space=vmem, size = 0x8000, scoped, tag = 'input window, operand 1, single buffered']
    #allocation6 [shape = 's32[1]{0}', space=sflag, size = 0x4, scoped, tag = 'scoped memory for tpu_custom_call.1']
    #allocation7 [shape = 'u8[4096]{0}', space=vmem, size = 0x1000, scoped, tag = 'output window, operand 0']
    %8 = vsyncpa [#allocation3], 0
    %s9 = scalar_lea.sflag [#allocation3], 1
    %10 = vsyncpa %s9, 0
    %11 = vsyncpa [#allocation6], 0
    %12 = vsyncpa [#allocation4], 0
    %s13 = scalar_lea.sflag [#allocation4], 1
    %14 = vsyncpa %s13, 0
    loop: start=0, step=1, limit=4
    $region2: #{tpu_custom_call.1} parent=1 // loop_pre_header
      _
    $region3: #{tpu_custom_call.1} parent=1 // loop_header
      %s16 = sphi 0, %s20
      %p17 = scmp.ge.s32.totalorder %s16, 4
      %s26 = sphi 0, %s28
      %s29 = sphi 0, %s26
      %s30 = sphi 0, %s29
      %s46 = sphi 0, %s30
      %s50 = sphi 0, %s50
      %s52 = sphi 0, %s50
      %s53 = sphi 0, %s52
      %s67 = sphi 0, %s53
      %s71 = sphi 0, %s71
      %s73 = sphi 0, %s71
      %s74 = sphi 0, %s73
      %s88 = sphi 0, %s74
      %s94 = sphi 0, %s96
      %s97 = sphi 0, %s94
      %s98 = sphi 0, %s97
      %s114 = sphi 0, %s98
    $region4: #{tpu_custom_call.1} parent=1 // loop_header_branch
      %19 = sbr.rel (%p17) target = $region8
    $region5: #{tpu_custom_call.1} parent=1 // loop_body
      %s21 = ssub.s32 %s16, 1
      %s22 = ssub.s32 %s16, 2
      %s23 = sadd.s32 %s16, 1
      %s24 = ssub.s32 %s16, %s23
      %p25 = scmp.eq.s32.totalorder %s24, 0
      %s27 = sadd.s32 %s26, 1
      %s28 = scalar_select %p25, %s26, %s27
      %p31 = pneg %p25
      %p32 = scmp.eq.s32.totalorder %s16, 1
      %p33 = por %p31, %p32
      %p34 = scmp.ne.s32.totalorder %s26, %s29
      %p35 = scmp.eq.s32.totalorder %s16, 0
      %p36 = por %p34, %p35
      %p37 = scmp.ne.s32.totalorder %s26, %s29
      %p38 = scmp.eq.s32.totalorder %s21, 1
      %p39 = por %p37, %p38
      %p40 = scmp.ne.s32.totalorder %s29, %s30
      %p41 = scmp.eq.s32.totalorder %s21, 0
      %p42 = por %p40, %p41
      %p43 = scmp.ne.s32.totalorder %s29, %s30
      %p44 = scmp.eq.s32.totalorder %s22, 1
      %p45 = por %p43, %p44
      %p47 = scmp.ne.s32.totalorder %s30, %s46
      %p48 = scmp.eq.s32.totalorder %s22, 0
      %p49 = por %p47, %p48
      %s51 = sadd.s32 %s50, 1
      %p54 = scmp.eq.s32.totalorder %s16, 1
      %p55 = scmp.ne.s32.totalorder %s50, %s52
      %p56 = scmp.eq.s32.totalorder %s16, 0
      %p57 = por %p55, %p56
      %p58 = scmp.ne.s32.totalorder %s50, %s52
      %p59 = scmp.eq.s32.totalorder %s21, 1
      %p60 = por %p58, %p59
      %p61 = scmp.ne.s32.totalorder %s52, %s53
      %p62 = scmp.eq.s32.totalorder %s21, 0
      %p63 = por %p61, %p62
      %p64 = scmp.ne.s32.totalorder %s52, %s53
      %p65 = scmp.eq.s32.totalorder %s22, 1
      %p66 = por %p64, %p65
      %p68 = scmp.ne.s32.totalorder %s53, %s67
      %p69 = scmp.eq.s32.totalorder %s22, 0
      %p70 = por %p68, %p69
      %s72 = sadd.s32 %s71, 1
      %p75 = scmp.eq.s32.totalorder %s16, 1
      %p76 = scmp.ne.s32.totalorder %s71, %s73
      %p77 = scmp.eq.s32.totalorder %s16, 0
      %p78 = por %p76, %p77
      %p79 = scmp.ne.s32.totalorder %s71, %s73
      %p80 = scmp.eq.s32.totalorder %s21, 1
      %p81 = por %p79, %p80
      %p82 = scmp.ne.s32.totalorder %s73, %s74
      %p83 = scmp.eq.s32.totalorder %s21, 0
      %p84 = por %p82, %p83
      %p85 = scmp.ne.s32.totalorder %s73, %s74
      %p86 = scmp.eq.s32.totalorder %s22, 1
      %p87 = por %p85, %p86
      %p89 = scmp.ne.s32.totalorder %s74, %s88
      %p90 = scmp.eq.s32.totalorder %s22, 0
      %p91 = por %p89, %p90
      %s92 = ssub.s32 %s16, %s23
      %p93 = scmp.eq.s32.totalorder %s92, 0
      %s95 = sadd.s32 %s94, 1
      %s96 = scalar_select %p93, %s94, %s95
      %p99 = pneg %p93
      %p100 = scmp.eq.s32.totalorder %s16, 1
      %p101 = por %p99, %p100
      %p102 = scmp.ne.s32.totalorder %s94, %s97
      %p103 = scmp.eq.s32.totalorder %s16, 0
      %p104 = por %p102, %p103
      %p105 = scmp.ne.s32.totalorder %s94, %s97
      %p106 = scmp.eq.s32.totalorder %s21, 1
      %p107 = por %p105, %p106
      %p108 = scmp.ne.s32.totalorder %s97, %s98
      %p109 = scmp.eq.s32.totalorder %s21, 0
      %p110 = por %p108, %p109
      %p111 = scmp.ne.s32.totalorder %s97, %s98
      %p112 = scmp.eq.s32.totalorder %s22, 1
      %p113 = por %p111, %p112
      %p115 = scmp.ne.s32.totalorder %s98, %s114
      %p116 = scmp.eq.s32.totalorder %s22, 0
      %p117 = por %p115, %p116
      %p118 = scmp.le.s32.totalorder 1, %s16
      %p119 = scmp.lt.s32.totalorder %s16, 3
      %p120 = pnand %p118, %p119
      %p121 = pneg %p120
      // Predicated region
      $region9: #{tpu_custom_call.1} parent=5 // pred_check
        _
      $region10: #{tpu_custom_call.1} parent=5 // pred_check_branch
        %123 = sbr.rel (%p120) target = $region12
      $region11: #{tpu_custom_call.1} parent=5 // pred_region
        %s124 = ssub.s32 %s16, 1
        // Predicated region
        $region13: #{tpu_custom_call.1} parent=11 // pred_check
          %p125 = pneg %p63
        $region14: #{tpu_custom_call.1} parent=11 // pred_check_branch
          %127 = sbr.rel (%p125) target = $region16
        $region15: #{tpu_custom_call.1} parent=11 // pred_region
          %129 = vsyncadd [#allocation6], 0
          %s130 = sshll.u32 %s1, 4
          %s131 = int_to_ptr.hbm [resolvable:$true] %s130
          %s132 = sshll.u32 [#allocation5], 4
          %s133 = int_to_ptr.vmem [resolvable:$true] %s132
          %138 = dma.hbm_to_vmem [thread:$0]  %s131, 1024, %s133, [#allocation6], 64, 64, 4
        $region16: #{tpu_custom_call.1} parent=11 // pred_fallthru
          _
        // Predicated region
        $region17: #{tpu_custom_call.1} parent=11 // pred_check
          %p139 = pneg %p84
        $region18: #{tpu_custom_call.1} parent=11 // pred_check_branch
          %141 = sbr.rel (%p139) target = $region20
        $region19: #{tpu_custom_call.1} parent=11 // pred_region
          _
        $region20: #{tpu_custom_call.1} parent=11 // pred_fallthru
          _
      $region12: #{tpu_custom_call.1} parent=5 // pred_fallthru
        _
      %p142 = scmp.lt.s32.totalorder %s16, 2
      // Predicated region
      $region21: #{tpu_custom_call.1} parent=5 // pred_check
        %p143 = pneg %p142
      $region22: #{tpu_custom_call.1} parent=5 // pred_check_branch
        %145 = sbr.rel (%p143) target = $region24
      $region23: #{tpu_custom_call.1} parent=5 // pred_region
        // Predicated region
        $region25: #{tpu_custom_call.1} parent=23 // pred_check
          %p146 = pneg %p36
        $region26: #{tpu_custom_call.1} parent=23 // pred_check_branch
          %148 = sbr.rel (%p146) target = $region28
        $region27: #{tpu_custom_call.1} parent=23 // pred_region
          %s149 = sand.u32 %s26, 1
          %s150 = scalar_lea.sflag [#allocation3], %s149
          %s151 = sand.u32 %s26, 1
          %s152 = smul.addr %s151, 4
          %s153 = scalar_lea.vmem [#allocation2], %s152
          %155 = vsyncadd %s150, 0
          %s156 = smul.addr %s16, 4
          %s157 = scalar_lea.hbm %s0, %s156
          %s159 = sshll.u32 %s157, 4
          %s160 = int_to_ptr.hbm [resolvable:$true] %s159
          %s161 = sshll.u32 %s153, 4
          %s162 = int_to_ptr.vmem [resolvable:$true] %s161
          %164 = dma.hbm_to_vmem [thread:$0]  %s160, 64, %s162, %s150
        $region28: #{tpu_custom_call.1} parent=23 // pred_fallthru
          _
      $region24: #{tpu_custom_call.1} parent=5 // pred_fallthru
        _
      %p165 = scmp.le.s32.totalorder 1, %s16
      %p166 = scmp.lt.s32.totalorder %s16, 3
      %p167 = pnand %p165, %p166
      %p168 = pneg %p167
      // Predicated region
      $region29: #{tpu_custom_call.1} parent=5 // pred_check
        _
      $region30: #{tpu_custom_call.1} parent=5 // pred_check_branch
        %170 = sbr.rel (%p167) target = $region32
      $region31: #{tpu_custom_call.1} parent=5 // pred_region
        %s171 = ssub.s32 %s16, 1
        %s172 = sand.u32 %s29, 1
        %s173 = scalar_lea.sflag [#allocation3], %s172
        %s174 = sand.u32 %s29, 1
        %s175 = smul.addr %s174, 4
        %s176 = scalar_lea.vmem [#allocation2], %s175
        // Predicated region
        $region33: #{tpu_custom_call.1} parent=31 // pred_check
          %p177 = pneg %p42
        $region34: #{tpu_custom_call.1} parent=31 // pred_check_branch
          %179 = sbr.rel (%p177) target = $region36
        $region35: #{tpu_custom_call.1} parent=31 // pred_region
          %181 = dma.done %s173, 64
        $region36: #{tpu_custom_call.1} parent=31 // pred_fallthru
          _
        // Predicated region
        $region37: #{tpu_custom_call.1} parent=31 // pred_check
          %p182 = pneg %p63
        $region38: #{tpu_custom_call.1} parent=31 // pred_check_branch
          %184 = sbr.rel (%p182) target = $region40
        $region39: #{tpu_custom_call.1} parent=31 // pred_region
          %186 = dma.done [#allocation6], 1024
        $region40: #{tpu_custom_call.1} parent=31 // pred_fallthru
          _
        %s187 = sand.u32 %s29, 1
        %s188 = scalar_lea.sflag [#allocation3], %s187
        %s189 = sand.u32 %s29, 1
        %s190 = smul.addr %s189, 4
        %s191 = scalar_lea.vmem [#allocation2], %s190
        %p192 = pneg %p42
        %p193 = pneg %p39
        %p194 = pneg %p63
        %p195 = pneg %p60
        %p196 = pneg %p84
        %p197 = pneg %p81
        %p198 = pneg %p110
        %p199 = pneg %p107
        %s200 = sand.u32 %s97, 1
        %s201 = scalar_lea.sflag [#allocation4], %s200
        %s202 = sand.u32 %s97, 1
        %s203 = smul.addr %s202, 4
        %s204 = scalar_lea.vmem [#allocation7], %s203
        %v205 = vld [vmem:[%s176] sm:$0xf]
        %v206 = vld [vmem:[#allocation5] sm:$0xf]
        %v207 = vld [vmem:[#allocation5 + $0x4] sm:$0xf]
        %v208 = vld [vmem:[#allocation5 + $0x8] sm:$0xf]
        %v209 = vld [vmem:[#allocation5 + $0xc] sm:$0xf]
        %v210 = vld [vmem:[#allocation5 + $0x10] sm:$0xf]
        %v211 = vld [vmem:[#allocation5 + $0x14] sm:$0xf]
        %v212 = vld [vmem:[#allocation5 + $0x18] sm:$0xf]
        %v213 = vld [vmem:[#allocation5 + $0x1c] sm:$0xf]
        %v214 = vld [vmem:[#allocation5 + $0x20] sm:$0xf]
        %v215 = vld [vmem:[#allocation5 + $0x24] sm:$0xf]
        %v216 = vld [vmem:[#allocation5 + $0x28] sm:$0xf]
        %v217 = vld [vmem:[#allocation5 + $0x2c] sm:$0xf]
        %v218 = vld [vmem:[#allocation5 + $0x30] sm:$0xf]
        %v219 = vld [vmem:[#allocation5 + $0x34] sm:$0xf]
        %v220 = vld [vmem:[#allocation5 + $0x38] sm:$0xf]
        %v221 = vld [vmem:[#allocation5 + $0x3c] sm:$0xf]
        %v222 = vld [vmem:[%s2] sm:$0x1]
        %v224 = vperm.slane %v222, 0
        %v242 = vunpack.c.l.b16 %v206
        %v243 = vunpack.c.l.b16 %v207
        %v244 = vunpack.c.l.b16 %v208
        %v245 = vunpack.c.l.b16 %v209
        %v246 = vunpack.c.l.b16 %v210
        %v247 = vunpack.c.l.b16 %v211
        %v248 = vunpack.c.l.b16 %v212
        %v249 = vunpack.c.l.b16 %v213
        %v250 = vunpack.c.l.b16 %v214
        %v251 = vunpack.c.l.b16 %v215
        %v252 = vunpack.c.l.b16 %v216
        %v253 = vunpack.c.l.b16 %v217
        %v254 = vunpack.c.l.b16 %v218
        %v255 = vunpack.c.l.b16 %v219
        %v256 = vunpack.c.l.b16 %v220
        %v257 = vunpack.c.l.b16 %v221
        %v258 = vpack.c.b16 %v243, %v242
        %v259 = vpack.c.b16 %v245, %v244
        %v260 = vpack.c.b16 %v247, %v246
        %v261 = vpack.c.b16 %v249, %v248
        %v262 = vpack.c.b16 %v251, %v250
        %v263 = vpack.c.b16 %v253, %v252
        %v264 = vpack.c.b16 %v255, %v254
        %v265 = vpack.c.b16 %v257, %v256
        %274 = vmatpush.bf16.msra.mxu0 %v265
        %275 = vmatpush.bf16.msra.mxu0 %v264
        %276 = vmatpush.bf16.msra.mxu0 %v263
        %277 = vmatpush.bf16.msra.mxu0 %v262
        %278 = vmatpush.bf16.msra.mxu0 %v261
        %279 = vmatpush.bf16.msra.mxu0 %v260
        %280 = vmatpush.bf16.msra.mxu0 %v259
        %281 = vmatpush.bf16.msra.mxu0 %v258
        %282 = vmatmul.bf16.gmra.mxu0 %v205
        %v283 = vpop.f32.mrf.mxu0
        %v284 = vadd.f32 %v224, %v283
        %v285 = vpop.f32.mrf.mxu0
        %286 = vdwg.mxu0
        %v287 = vmax.f32 %v284, 0.0
        %v288 = vpack.c.bf16 %v287, %v287
        %289 = vst [vmem:[%s204] sm:$0xf] %v288
        %s290 = sand.u32 %s97, 1
        %s291 = scalar_lea.sflag [#allocation4], %s290
        %s292 = sand.u32 %s97, 1
        %s293 = smul.addr %s292, 4
        %s294 = scalar_lea.vmem [#allocation7], %s293
        // Predicated region
        $region41: #{tpu_custom_call.1} parent=31 // pred_check
          %p295 = pneg %p107
        $region42: #{tpu_custom_call.1} parent=31 // pred_check_branch
          %297 = sbr.rel (%p295) target = $region44
        $region43: #{tpu_custom_call.1} parent=31 // pred_region
          %299 = vsyncadd %s291, 0
          %s300 = smul.addr %s21, 4
          %s301 = scalar_lea.hbm %s3, %s300
          %s303 = sshll.u32 %s294, 4
          %s304 = int_to_ptr.vmem [resolvable:$true] %s303
          %s305 = sshll.u32 %s301, 4
          %s306 = int_to_ptr.hbm [resolvable:$true] %s305
          %308 = dma.vmem_to_hbm [thread:$0]  %s304, 64, %s306, %s291
        $region44: #{tpu_custom_call.1} parent=31 // pred_fallthru
          _
      $region32: #{tpu_custom_call.1} parent=5 // pred_fallthru
        _
      %p309 = scmp.le.s32.totalorder 2, %s16
      // Predicated region
      $region45: #{tpu_custom_call.1} parent=5 // pred_check
        %p310 = pneg %p309
      $region46: #{tpu_custom_call.1} parent=5 // pred_check_branch
        %312 = sbr.rel (%p310) target = $region48
      $region47: #{tpu_custom_call.1} parent=5 // pred_region
        %s313 = ssub.s32 %s16, 2
        // Predicated region
        $region49: #{tpu_custom_call.1} parent=47 // pred_check
          %p314 = pneg %p113
        $region50: #{tpu_custom_call.1} parent=47 // pred_check_branch
          %316 = sbr.rel (%p314) target = $region52
        $region51: #{tpu_custom_call.1} parent=47 // pred_region
          %s317 = sand.u32 %s98, 1
          %s318 = scalar_lea.sflag [#allocation4], %s317
          %s319 = sand.u32 %s98, 1
          %s320 = smul.addr %s319, 4
          %s321 = scalar_lea.vmem [#allocation7], %s320
          %323 = dma.done %s318, 64
        $region52: #{tpu_custom_call.1} parent=47 // pred_fallthru
          _
      $region48: #{tpu_custom_call.1} parent=5 // pred_fallthru
        _
    $region6: #{tpu_custom_call.1} parent=1 // loop_footer
      %s20 = sadd.s32 1, %s16
    $region7: #{tpu_custom_call.1} parent=1 // loop_footer_branch
      %15 = sbr.rel target = $region3
    $region8: #{tpu_custom_call.1} parent=1 // loop_exit
      _
    %324 = vsyncpa [#allocation3], 1
    %s325 = scalar_lea.sflag [#allocation3], 1
    %326 = vsyncpa %s325, 1
    %327 = vsyncpa [#allocation6], 1
    %328 = vsyncpa [#allocation4], 1
    %s329 = scalar_lea.sflag [#allocation4], 1
    %330 = vsyncpa %s329, 1

</llo_original>
